<compile_context>
chip_gen: v7x
topology: tpu7x:2x2x1
jax: 0.10.0
libtpu: 0.0.40
codegen_flags: <defaults>
</compile_context>

<pallas_src>
import jax
import jax.numpy as jnp
from jax import lax
from jax.experimental import pallas as pl
from jax.experimental.pallas import tpu as pltpu


def _round_up(x, m):
    return ((x + m - 1) // m) * m


# ---------------------------------------------------------------------------
# Fast path: default (arange) position ids -> single HBM->HBM DMA of the
# first S rows of the table.  No wrapper pre-slice, no VMEM staging.
# ---------------------------------------------------------------------------
def _slab_copy_kernel(pe_hbm, out_hbm, sem):
    s = out_hbm.shape[0]
    cp = pltpu.make_async_copy(pe_hbm.at[pl.ds(0, s)], out_hbm, sem)
    cp.start()
    cp.wait()


def _arange_positional_encoding(pe_weight, seq_length):
    max_pos, d = pe_weight.shape
    del max_pos
    return pl.pallas_call(
        _slab_copy_kernel,
        out_shape=jax.ShapeDtypeStruct((seq_length, d), pe_weight.dtype),
        in_specs=[pl.BlockSpec(memory_space=pl.ANY)],   # full table stays in HBM
        out_specs=pl.BlockSpec(memory_space=pl.ANY),    # DMA writes HBM directly
        scratch_shapes=[pltpu.SemaphoreType.DMA],
        compiler_params=pltpu.CompilerParams(has_side_effects=True),
    )(pe_weight)


# ---------------------------------------------------------------------------
# General path: arbitrary position_ids -> resident-table one-hot MXU gather.
# ---------------------------------------------------------------------------
def _gather_kernel(ids_ref, pe_ref, out_ref):
    # ids_ref: (tile_s, 1) int32 block of position ids
    # pe_ref : (max_pos, D) table, untiled & resident in VMEM (single-buffered)
    # out_ref: (tile_s, D) dense output tile
    tile_s = out_ref.shape[0]
    max_pos = pe_ref.shape[0]
    ids = ids_ref[...]                                          # (tile_s, 1)
    pos = lax.broadcasted_iota(jnp.int32, (tile_s, max_pos), 1)
    onehot = (ids == pos).astype(pe_ref.dtype)                  # (tile_s, max_pos)
    out_ref[...] = jnp.dot(
        onehot, pe_ref[...], preferred_element_type=jnp.float32
    ).astype(out_ref.dtype)


def _gather_positional_encoding(pe_weight, ids):
    max_pos, d = pe_weight.shape
    (s,) = ids.shape
    itemsize = jnp.dtype(pe_weight.dtype).itemsize
    # sublane granularity: 8 for f32, 16 for bf16, 32 for 8-bit types
    sub = max(8, 32 // itemsize)
    tile_s = _round_up(min(s, 512), sub)
    # keep the per-step one-hot matrix (tile_s x max_pos, f32) modest (~2 MiB)
    cap = ((2 * 1024 * 1024) // (4 * max_pos)) // sub * sub
    if cap >= sub:
        tile_s = min(tile_s, cap)
    tile_s = max(tile_s, sub)

    ids2d = ids.reshape(s, 1)
    grid = (pl.cdiv(s, tile_s),)

    # TODO(synk): for embedding tables too large to sit resident in VMEM
    # (>~40 MiB, esp. on v7x), switch to a chunked HBM-side DMA gather
    # (memory_space=pl.ANY + per-row make_async_copy into a dense scratch).
    return pl.pallas_call(
        _gather_kernel,
        out_shape=jax.ShapeDtypeStruct((s, d), pe_weight.dtype),
        grid=grid,
        in_specs=[
            pl.BlockSpec((tile_s, 1), lambda i: (i, 0)),           # ids column
            pl.BlockSpec(memory_space=pltpu.MemorySpace.VMEM),     # resident table
        ],
        out_specs=pl.BlockSpec((tile_s, d), lambda i: (i, 0)),
        compiler_params=pltpu.CompilerParams(
            dimension_semantics=("parallel",),
            vmem_limit_bytes=48 * 1024 * 1024,   # headroom on v7x's 64 MiB VMEM
        ),
    )(ids2d, pe_weight)


# ---------------------------------------------------------------------------
# Module-level wrapper (mirrors the PyTorch forward).
# ---------------------------------------------------------------------------
def learned_positional_encoding(pe_weight, seq_length, position_ids=None):
    """Returns (1, S, D) position embeddings, matching the PyTorch module."""
    pe_weight = jnp.asarray(pe_weight)
    max_pos, _ = pe_weight.shape
    S = int(seq_length)
    if S > max_pos:
        raise ValueError(
            f"seq_length ({S}) exceeds max_position_embeddings ({max_pos})")

    if position_ids is None:
        # Default ids are arange(S): a contiguous slice, not a gather.
        out2d = _arange_positional_encoding(pe_weight, S)
    else:
        ids = jnp.asarray(position_ids).reshape(-1)
        if ids.shape[0] < S:
            raise ValueError(
                f"position_ids provides {ids.shape[0]} positions, "
                f"need at least seq_length={S}")
        ids = jnp.clip(ids[:S].astype(jnp.int32), 0, max_pos - 1)
        out2d = _gather_positional_encoding(pe_weight, ids)

    return out2d[None]   # add the size-1 batch dim outside the kernel


class LearnedPositionalEncodingJAX:
    """Thin wrapper mirroring the PyTorch module's constructor/forward."""

    def __init__(self, max_position_embeddings, embedding_dim, seq_length, key):
        # nn.Embedding default init: weight ~ N(0, 1)
        self.pe_weight = jax.random.normal(
            key, (max_position_embeddings, embedding_dim), dtype=jnp.float32)
        self.seq_length = seq_length
        self.position_ids = jnp.arange(seq_length, dtype=jnp.int32)[None, :]

    def __call__(self, x, position_ids=None):
        # x is accepted for signature fidelity but unused, exactly as in PyTorch.
        del x
        return learned_positional_encoding(
            self.pe_weight, self.seq_length, position_ids)


if __name__ == "__main__":
    key = jax.random.PRNGKey(0)
    k_w, k_x, k_ids = jax.random.split(key, 3)

    max_position_embeddings = 16
    embedding_dim = 128
    seq_length = 8

    module = LearnedPositionalEncodingJAX(
        max_position_embeddings, embedding_dim, seq_length, k_w)

    # Example input x (unused by forward, matches module semantics).
    x = jax.random.normal(k_x, (2, seq_length, embedding_dim), dtype=jnp.float32)

    # 1) Default (arange) path -> single HBM->HBM DMA kernel.
    out_default = jax.block_until_ready(module(x))
    ref_default = module.pe_weight[:seq_length][None]
    assert out_default.shape == (1, seq_length, embedding_dim), out_default.shape
    assert jnp.allclose(out_default, ref_default), "default-path mismatch"

    # 2) Explicit position_ids -> resident-table one-hot MXU gather kernel.
    ids = jax.random.randint(
        k_ids, (1, seq_length), 0, max_position_embeddings, dtype=jnp.int32)
    out_gather = jax.block_until_ready(module(x, ids))
    ref_gather = module.pe_weight[ids[0]][None]
    assert out_gather.shape == (1, seq_length, embedding_dim), out_gather.shape
    assert jnp.allclose(out_gather, ref_gather), "gather-path mismatch"

    print("KERNEL_OK")
</pallas_src>

<mosaic_0001>
module attributes {stable_mosaic.version = 11 : i64} {
  func.func @_slab_copy_kernel(%arg0: memref<16x128xf32, #tpu.memory_space<any>>, %arg1: memref<8x128xf32, #tpu.memory_space<any>>, %arg2: memref<!tpu.dma_semaphore, #tpu.memory_space<semaphore_mem>>) attributes {dimension_semantics = [], scalar_prefetch = 0 : i64, scratch_operands = 1 : i64, tpu.core_type = #tpu.core_type<tc>} {
    %c0_i32 = arith.constant 0 : i32
    %c0_i32_0 = arith.constant 0 : i32
    %0 = tpu.memref_slice %arg0[%c0_i32, %c0_i32_0] : memref<16x128xf32, #tpu.memory_space<any>> -> memref<8x128xf32, #tpu.memory_space<any>>
    tpu.enqueue_dma source(%0 : memref<8x128xf32, #tpu.memory_space<any>>) target(%arg1 : memref<8x128xf32, #tpu.memory_space<any>>) target_semaphore(%arg2 : memref<!tpu.dma_semaphore, #tpu.memory_space<semaphore_mem>>)
    %c0_i32_1 = arith.constant 0 : i32
    %c0_i32_2 = arith.constant 0 : i32
    %1 = tpu.memref_slice %arg0[%c0_i32_1, %c0_i32_2] : memref<16x128xf32, #tpu.memory_space<any>> -> memref<8x128xf32, #tpu.memory_space<any>>
    tpu.wait_dma2 semaphore(%arg2 : memref<!tpu.dma_semaphore, #tpu.memory_space<semaphore_mem>>) src(%1 : memref<8x128xf32, #tpu.memory_space<any>>) dst(%arg1 : memref<8x128xf32, #tpu.memory_space<any>>)
    return
  }
}

</mosaic_0001>

<llo_original>
// kernel: tpu_custom_call.1
$region0: #{tpu_custom_call.1}
  #allocation0 [shape = 'u32[]', space=smem, size = 0x4, offset = 0x4, fixed_abs, tag = 'smem constant byte address 0x4 - core index']
  #allocation1 [shape = 'u32[144,128]{1,0:T(1,128)}', space=vmem, size = 0x12000, scoped, tag = 'internal scratch']
  #allocation2 [shape = 's32[1]{0}', space=sflag, size = 0x4, scoped, tag = 'scratch operand']
  #allocation3 [shape = 's32[]', space=sflag, size = 0x4, offset = 0, fixed_abs, tag = 'sflag constant byte address 0x0 - dummy sync flag']
  #allocation4 [shape = 'u32[0]{0}', space=smem, size = 0, offset = 0, fixed_abs, tag = 'smem constant byte address 0x0 - null']
  %s0 = inlined_call_operand.hbm [shape: f32[16,128], index: 0, kind: input, shape index: {}]
  %s1 = inlined_call_operand.hbm [shape: f32[8,128], index: 1, kind: output, shape index: {}]
  %s2 = sld [smem:[#allocation0]]
  $region2: #{tpu_custom_call.1} parent=0
    _
  %s4 = ssub.s32 1, %s2
  %s5 = scalar_select 0, %s4, %s2
  %s7 = sshll.u32 1, 14
  %s8 = sxor.u32 4294967295, %s7
  %s11 = sshll.u32 3, 24
  %s12 = sxor.u32 4294967295, %s11
  %s13 = sand.u32 0, %s12
  %s15 = sor.u32 %s13, 0
  %18 = dma.general %s0, 128, %s1, [#allocation2], [#allocation3], [#allocation4], %s15, 0
  %s19 = smul.u32 8, 1
  %s20 = sshll.u32 %s19, 4
  %21 = dma.done [#allocation2], %s20
  %22 = vsyncmov [#allocation2]
  %s23 = vpop.sfrf %22
  %p24 = scmp.eq.s32.totalorder %s23, 0
  %p25 = pneg %p24
  %27 = shalt.err (%p25)

</llo_original>
